<compile_context>
chip_gen: v7x
topology: tpu7x:2x2x1
jax: 0.10.0
libtpu: 0.0.40
codegen_flags: <defaults>
</compile_context>

<pallas_src>
import functools
import math

import jax
import jax.numpy as jnp
from jax.experimental import pallas as pl
from jax.experimental.pallas import tpu as pltpu


# ----------------------------------------------------------------------------
# Pallas kernels
# ----------------------------------------------------------------------------
def _mapping_kernel(w_ref, b_ref, z_ref, o_ref, *, nb_layers):
    """MappingNetwork: nb_layers x (Linear + LeakyReLU(0.2)), transposed layout.

    w_ref:(nl,L,L) in PyTorch (out,in) layout, b_ref:(nl,L,1), z_ref:(L,B), o_ref:(L,B).
    All layers are chained inside one kernel (single HBM round trip).
    """
    h = z_ref[...]
    for k in range(nb_layers):
        h = jnp.dot(w_ref[k], h, preferred_element_type=jnp.float32) + b_ref[k]
        h = jnp.where(h > 0.0, h, 0.2 * h)
    o_ref[...] = h


def _stage_kernel(*refs, Cout, HWp, taps, hw_count, has_conv, final_tanh):
    """One fused synthesis half-stage; one image per grid step (grid over B).

    [conv3x3 (9 in-kernel taps, bf16 MXU) + bias] -> + noise_w * noise -> LeakyReLU(0.2)
      -> InstanceNorm2d (masked, biased var, eps=1e-5) -> AdaIN(style = S_w @ w + S_b)
      [-> 1x1 out_conv + tanh   when final_tanh]

    Layout: channels on sublanes, flattened padded spatial H*(W+2) on lanes, so the
    MXU output columns and the stores are lane-dense.
    """
    it = iter(refs)
    x_ref = next(it)                    # conv: (Cin,(H+3)*Wp)  no-conv: (Cout,HWp)
    if has_conv:
        cw_ref = next(it)               # (9, Cout, Cin) bf16, tap-major (dy*3+dx)
        cb_ref = next(it)               # (Cout, 1)
    nw_ref = next(it)                   # (Cout, 1)  AddNoise per-channel weight
    nz_ref = next(it)                   # (1, HWp)   per-image spatial noise
    sw_ref = next(it)                   # (2*Cout, L) AdaIN style linear weight (out,in)
    sb_ref = next(it)                   # (2*Cout, 1)
    wl_ref = next(it)                   # (L, 1)     latent w column for this image
    mk_ref = next(it)                   # (1, HWp)   1.0 valid cols / 0.0 pad cols
    if final_tanh:
        fw_ref = next(it)               # (img_ch, Cout) 1x1 out_conv weight
        fb_ref = next(it)               # (img_ch, 1)
    o_ref = next(it)

    if has_conv:
        acc = None
        for t, off in enumerate(taps):  # 9 static lane-slices, no im2col in HBM
            xs = x_ref[:, off:off + HWp].astype(jnp.bfloat16)        # (Cin, HWp)
            part = jnp.dot(cw_ref[t], xs, preferred_element_type=jnp.float32)
            acc = part if acc is None else acc + part
        y = acc + cb_ref[...]
    else:
        y = x_ref[...]

    # AddNoise + LeakyReLU(0.2)
    y = y + nw_ref[...] * nz_ref[...]
    y = jnp.where(y > 0.0, y, 0.2 * y)

    # InstanceNorm2d over the valid spatial positions only (pad columns masked out).
    mask = mk_ref[...]
    inv_n = 1.0 / hw_count
    mean = jnp.sum(y * mask, axis=1, keepdims=True) * inv_n          # (Cout, 1)
    diff = y - mean
    var = jnp.sum(diff * diff * mask, axis=1, keepdims=True) * inv_n
    xn = diff * jax.lax.rsqrt(var + 1e-5)

    # AdaIN style modulation: styles = style_lin(w)  -> scale rows [:C], shift rows [C:]
    styles = jnp.dot(sw_ref[...], wl_ref[...],
                     preferred_element_type=jnp.float32) + sb_ref[...]   # (2C, 1)
    out = (xn * (1.0 + styles[:Cout, :]) + styles[Cout:, :]) * mask

    if final_tanh:
        img = jnp.dot(fw_ref[...], out, preferred_element_type=jnp.float32) + fb_ref[...]
        o_ref[...] = jnp.tanh(img)
    else:
        o_ref[...] = out


# ----------------------------------------------------------------------------
# Pallas wrappers
# ----------------------------------------------------------------------------
def mapping_network(map_w, map_b, z):
    """z:(B,L) -> per-image latent columns (B, L, 1)."""
    B, L = z.shape
    kernel = functools.partial(_mapping_kernel, nb_layers=map_w.shape[0])
    w_t = pl.pallas_call(
        kernel,
        out_shape=jax.ShapeDtypeStruct((L, B), jnp.float32),
    )(map_w, map_b, jnp.transpose(z))
    return jnp.transpose(w_t).reshape(B, L, 1)


def synthesis_stage(x, conv_w, conv_b, noise_w, noise, style_w, style_b,
                    w_cols, mask, *, H, W, has_conv, final_tanh=False,
                    final_w=None, final_b=None):
    """One fused half-stage.  Returns (B, C_out, H*(W+2)) with zeroed pad columns."""
    B = noise.shape[0]
    L = w_cols.shape[1]
    Wp = W + 2
    HWp = H * Wp
    if has_conv:
        Cout, Cin = conv_w.shape[1], conv_w.shape[2]
        Lp = (H + 3) * Wp
    else:
        Cout = x.shape[1]
    C_arr = final_w.shape[0] if final_tanh else Cout
    taps = tuple(dy * Wp + dx for dy in range(3) for dx in range(3))

    in_arrays, in_specs = [], []
    if has_conv:
        in_arrays += [x, conv_w, conv_b.reshape(Cout, 1)]
        in_specs += [
            pl.BlockSpec((None, Cin, Lp), lambda b: (b, 0, 0)),
            pl.BlockSpec((9, Cout, Cin), lambda b: (0, 0, 0)),
            pl.BlockSpec((Cout, 1), lambda b: (0, 0)),
        ]
    else:
        in_arrays += [x]
        in_specs += [pl.BlockSpec((None, Cout, HWp), lambda b: (b, 0, 0))]
    in_arrays += [noise_w.reshape(Cout, 1), noise, style_w,
                  style_b.reshape(2 * Cout, 1), w_cols, mask]
    in_specs += [
        pl.BlockSpec((Cout, 1), lambda b: (0, 0)),
        pl.BlockSpec((None, 1, HWp), lambda b: (b, 0, 0)),
        pl.BlockSpec((2 * Cout, L), lambda b: (0, 0)),
        pl.BlockSpec((2 * Cout, 1), lambda b: (0, 0)),
        pl.BlockSpec((None, L, 1), lambda b: (b, 0, 0)),
        pl.BlockSpec((1, HWp), lambda b: (0, 0)),
    ]
    if final_tanh:
        in_arrays += [final_w, final_b.reshape(C_arr, 1)]
        in_specs += [
            pl.BlockSpec((C_arr, Cout), lambda b: (0, 0)),
            pl.BlockSpec((C_arr, 1), lambda b: (0, 0)),
        ]

    kernel = functools.partial(
        _stage_kernel, Cout=Cout, HWp=HWp, taps=taps,
        hw_count=float(H * W), has_conv=has_conv, final_tanh=final_tanh)
    return pl.pallas_call(
        kernel,
        grid=(B,),
        in_specs=in_specs,
        out_specs=pl.BlockSpec((None, C_arr, HWp), lambda b: (b, 0, 0)),
        out_shape=jax.ShapeDtypeStruct((B, C_arr, HWp), jnp.float32),
        compiler_params=pltpu.CompilerParams(
            dimension_semantics=("parallel",)),
    )(*in_arrays)


# ----------------------------------------------------------------------------
# Layout glue (padded-flat format helpers)
# ----------------------------------------------------------------------------
def _to_padded_flat(x_nchw):
    """NCHW -> (B, C, (H+3)*(W+2)) zero-padded flat image ready for the conv taps."""
    B, C, H, W = x_nchw.shape
    xp = jnp.pad(x_nchw, ((0, 0), (0, 0), (1, 2), (1, 1)))
    return xp.reshape(B, C, (H + 3) * (W + 2))


def _chain_pad(h_flat, H, W):
    """Stage output (pad cols already zero) -> next conv input with a single pad."""
    Wp = W + 2
    return jnp.pad(h_flat, ((0, 0), (0, 0), (Wp + 1, 2 * Wp - 1)))


def _unflatten(h_flat, H, W):
    """(B, C, H*(W+2)) -> NCHW (B, C, H, W)."""
    B, C = h_flat.shape[0], h_flat.shape[1]
    return h_flat.reshape(B, C, H, W + 2)[:, :, :, :W]


def _valid_mask(H, W):
    Wp = W + 2
    return (jnp.arange(H * Wp) % Wp < W).astype(jnp.float32).reshape(1, H * Wp)


def _spatial_noise(key, B, H, W):
    """Per-image spatial noise shared across channels, embedded in the padded-flat grid."""
    n = jax.random.normal(key, (B, H, W), jnp.float32)
    return jnp.pad(n, ((0, 0), (0, 0), (0, 2))).reshape(B, 1, H * (W + 2))


# ----------------------------------------------------------------------------
# Parameter construction (deterministic; matches the module __init__ shapes)
# ----------------------------------------------------------------------------
def _uniform(key, shape, bound):
    return jax.random.uniform(key, shape, minval=-bound, maxval=bound, dtype=jnp.float32)


def init_linear_t(key, fan_in, fan_out):
    """PyTorch Linear layout: weight (out, in), bias (out,)."""
    kw, kb = jax.random.split(key)
    bound = 1.0 / math.sqrt(fan_in)
    return _uniform(kw, (fan_out, fan_in), bound), _uniform(kb, (fan_out,), bound)


def init_conv3x3(key, cin, cout):
    """Conv weight stored tap-major (dy*3+dx, Cout, Cin) in bf16 for the MXU."""
    kw, kb = jax.random.split(key)
    bound = 1.0 / math.sqrt(cin * 9)
    w = _uniform(kw, (9, cout, cin), bound).astype(jnp.bfloat16)
    b = _uniform(kb, (cout,), bound)
    return w, b


def init_stylegan_params(key, latent_dim, nb_layers_mapping, img_channel,
                         init_channel, start_size, nb_blocks):
    keys = iter(jax.random.split(key, 64))
    params = {}

    # MappingNetwork
    mw, mb = [], []
    for _ in range(nb_layers_mapping):
        W_, b_ = init_linear_t(next(keys), latent_dim, latent_dim)
        mw.append(W_)
        mb.append(b_.reshape(latent_dim, 1))
    params["map_w"] = jnp.stack(mw)            # (nl, L, L)
    params["map_b"] = jnp.stack(mb)            # (nl, L, 1)

    # InitSynthesisBlock
    C = init_channel
    ib = {
        "init_constant": jnp.ones((1, C, start_size, start_size), jnp.float32),
        "bias_init": jnp.ones((C,), jnp.float32),
        "noise_w1": jnp.zeros((C,), jnp.float32),   # AddNoise weights init to zeros
        "noise_w2": jnp.zeros((C,), jnp.float32),
    }
    ib["ada1_w"], ib["ada1_b"] = init_linear_t(next(keys), latent_dim, 2 * C)
    ib["conv_w"], ib["conv_b"] = init_conv3x3(next(keys), C, C)
    ib["ada2_w"], ib["ada2_b"] = init_linear_t(next(keys), latent_dim, 2 * C)
    params["init"] = ib

    # SynthesisBlocks
    blocks = []
    for i in range(nb_blocks):
        cin = init_channel // (2 ** i)
        cout = cin // 2
        blk = {}
        blk["up_conv_w"], blk["up_conv_b"] = init_conv3x3(next(keys), cin, cout)
        blk["noise_w1"] = jnp.zeros((cout,), jnp.float32)
        blk["ada1_w"], blk["ada1_b"] = init_linear_t(next(keys), latent_dim, 2 * cout)
        blk["conv_w"], blk["conv_b"] = init_conv3x3(next(keys), cout, cout)
        blk["noise_w2"] = jnp.zeros((cout,), jnp.float32)
        blk["ada2_w"], blk["ada2_b"] = init_linear_t(next(keys), latent_dim, 2 * cout)
        blocks.append(blk)
    params["blocks"] = blocks

    # out_conv: 1x1 conv to img_channel
    cfinal = init_channel // (2 ** nb_blocks)
    kw, kb = jax.random.split(next(keys))
    bound = 1.0 / math.sqrt(cfinal)
    params["out_conv_w"] = _uniform(kw, (img_channel, cfinal), bound)
    params["out_conv_b"] = _uniform(kb, (img_channel,), bound)
    return params


# ----------------------------------------------------------------------------
# Forward pass  (== StyleGAN generator forward == StyleGenerator(z))
# ----------------------------------------------------------------------------
def stylegan_forward(params, z, noise_key):
    assert len(params["blocks"]) >= 1
    B = z.shape[0]

    # ---- MappingNetwork ----
    w_cols = mapping_network(params["map_w"], params["map_b"], z)   # (B, L, 1)

    # ---- InitSynthesisBlock ----
    ip = params["init"]
    C = ip["init_constant"].shape[1]
    H = W = ip["init_constant"].shape[2]

    x0 = ip["init_constant"] + ip["bias_init"].reshape(1, -1, 1, 1)   # (1,C,H,W)
    x0 = jnp.broadcast_to(x0, (B, C, H, W))
    x0 = jnp.pad(x0, ((0, 0), (0, 0), (0, 0), (0, 2))).reshape(B, C, H * (W + 2))

    noise_key, k = jax.random.split(noise_key)
    h = synthesis_stage(x0, None, None, ip["noise_w1"], _spatial_noise(k, B, H, W),
                        ip["ada1_w"], ip["ada1_b"], w_cols, _valid_mask(H, W),
                        H=H, W=W, has_conv=False)

    noise_key, k = jax.random.split(noise_key)
    h = synthesis_stage(_chain_pad(h, H, W), ip["conv_w"], ip["conv_b"],
                        ip["noise_w2"], _spatial_noise(k, B, H, W),
                        ip["ada2_w"], ip["ada2_b"], w_cols, _valid_mask(H, W),
                        H=H, W=W, has_conv=True)

    # ---- SynthesisBlocks ----
    nb = len(params["blocks"])
    for bi, bp in enumerate(params["blocks"]):
        # 2x nearest-neighbor upsample, then re-pad for the up_conv.
        # TODO(synk): fuse the upsample into the up_conv tap reads (subpixel decomposition)
        #             to avoid the HBM round trip of the upsampled tensor.
        x_nchw = _unflatten(h, H, W)
        x_up = jnp.repeat(jnp.repeat(x_nchw, 2, axis=2), 2, axis=3)
        H, W = 2 * H, 2 * W

        noise_key, k = jax.random.split(noise_key)
        h = synthesis_stage(_to_padded_flat(x_up), bp["up_conv_w"], bp["up_conv_b"],
                            bp["noise_w1"], _spatial_noise(k, B, H, W),
                            bp["ada1_w"], bp["ada1_b"], w_cols, _valid_mask(H, W),
                            H=H, W=W, has_conv=True)

        is_last = (bi == nb - 1)
        noise_key, k = jax.random.split(noise_key)
        h = synthesis_stage(_chain_pad(h, H, W), bp["conv_w"], bp["conv_b"],
                            bp["noise_w2"], _spatial_noise(k, B, H, W),
                            bp["ada2_w"], bp["ada2_b"], w_cols, _valid_mask(H, W),
                            H=H, W=W, has_conv=True, final_tanh=is_last,
                            final_w=params["out_conv_w"] if is_last else None,
                            final_b=params["out_conv_b"] if is_last else None)

    # h: (B, img_channel, H*(W+2)) already tanh'd; drop pad columns -> NCHW.
    return _unflatten(h, H, W)


# TODO(synk): Discriminator/BlurLayer, Adam optimizers, BCE losses and training steps are
#             not part of the generator forward pass -> not implemented here.
# TODO(synk): for production-scale StyleGAN (init_channel=512, 1024x1024) add spatial (HW)
#             and K grid axes with VMEM scratch accumulators + two-pass instance-norm stats
#             so per-image blocks stay within v7x's 64 MiB VMEM.

# ----------------------------------------------------------------------------
# Main
# ----------------------------------------------------------------------------
if __name__ == "__main__":
    config = {
        "model": {
            "latent_dim": 32,
            "start_channel": 8,        # discriminator-only (unused in forward)
            "nb_blocks_discr": 2,      # discriminator-only (unused in forward)
            "nb_layers_mapping": 3,
            "init_channel": 16,
            "start_size": 4,
        },
    }
    img_shape = (1, 16, 16)            # (img_channel, H, W); generator output matches
    nb_blocks = 2

    key = jax.random.PRNGKey(0)
    k_params, k_z, k_noise = jax.random.split(key, 3)

    params = init_stylegan_params(
        k_params,
        latent_dim=config["model"]["latent_dim"],
        nb_layers_mapping=config["model"]["nb_layers_mapping"],
        img_channel=img_shape[0],
        init_channel=config["model"]["init_channel"],
        start_size=config["model"]["start_size"],
        nb_blocks=nb_blocks,
    )

    z = jax.random.normal(k_z, (2, config["model"]["latent_dim"]), jnp.float32)
    out = stylegan_forward(params, z, k_noise)
    out = jax.block_until_ready(out)

    expected = (2, img_shape[0],
                config["model"]["start_size"] * (2 ** nb_blocks),
                config["model"]["start_size"] * (2 ** nb_blocks))
    assert out.shape == expected, (out.shape, expected)
    assert bool(jnp.all(jnp.isfinite(out)))
    print("KERNEL_OK")
</pallas_src>

<mosaic_0001>
module attributes {stable_mosaic.version = 11 : i64} {
  func.func @_mapping_kernel(%arg0: memref<3x32x32xf32, #tpu.memory_space<vmem>>, %arg1: memref<3x32x1xf32, #tpu.memory_space<vmem>>, %arg2: memref<32x2xf32, #tpu.memory_space<vmem>>, %arg3: memref<32x2xf32, #tpu.memory_space<vmem>>) attributes {dimension_semantics = [], scalar_prefetch = 0 : i64, scratch_operands = 0 : i64, tpu.core_type = #tpu.core_type<tc>} {
    %c0 = arith.constant 0 : index
    %c0_0 = arith.constant 0 : index
    %0 = vector.load %arg2[%c0, %c0_0] : memref<32x2xf32, #tpu.memory_space<vmem>>, vector<32x2xf32>
    %c0_1 = arith.constant 0 : index
    %c0_2 = arith.constant 0 : index
    %c0_3 = arith.constant 0 : index
    %1 = vector.load %arg0[%c0_1, %c0_2, %c0_3] : memref<3x32x32xf32, #tpu.memory_space<vmem>>, vector<1x32x32xf32>
    %2 = vector.shape_cast %1 : vector<1x32x32xf32> to vector<32x32xf32>
    %cst = arith.constant dense<0.000000e+00> : vector<32x2xf32>
    %3 = tpu.matmul %2, %0, %cst {dimension_numbers = #tpu.dot_dimension_numbers<[1], [0], [0], [1], [0, 0, 1, 1], [], []>} : vector<32x32xf32>, vector<32x2xf32>, vector<32x2xf32> -> vector<32x2xf32>
    %c0_4 = arith.constant 0 : index
    %c0_5 = arith.constant 0 : index
    %c0_6 = arith.constant 0 : index
    %4 = vector.load %arg1[%c0_4, %c0_5, %c0_6] : memref<3x32x1xf32, #tpu.memory_space<vmem>>, vector<1x32x1xf32>
    %5 = vector.shape_cast %4 : vector<1x32x1xf32> to vector<32x1xf32>
    %6 = vector.broadcast %5 : vector<32x1xf32> to vector<32x2xf32>
    %7 = arith.addf %3, %6 : vector<32x2xf32>
    %cst_7 = arith.constant 0.000000e+00 : f32
    %8 = vector.broadcast %cst_7 : f32 to vector<32x2xf32>
    %9 = arith.cmpf ogt, %7, %8 : vector<32x2xf32>
    %cst_8 = arith.constant 2.000000e-01 : f32
    %10 = vector.broadcast %cst_8 : f32 to vector<32x2xf32>
    %11 = arith.mulf %10, %7 : vector<32x2xf32>
    %12 = arith.select %9, %7, %11 : vector<32x2xi1>, vector<32x2xf32>
    %c1 = arith.constant 1 : index
    %c0_9 = arith.constant 0 : index
    %c0_10 = arith.constant 0 : index
    %13 = vector.load %arg0[%c1, %c0_9, %c0_10] : memref<3x32x32xf32, #tpu.memory_space<vmem>>, vector<1x32x32xf32>
    %14 = vector.shape_cast %13 : vector<1x32x32xf32> to vector<32x32xf32>
    %cst_11 = arith.constant dense<0.000000e+00> : vector<32x2xf32>
    %15 = tpu.matmul %14, %12, %cst_11 {dimension_numbers = #tpu.dot_dimension_numbers<[1], [0], [0], [1], [0, 0, 1, 1], [], []>} : vector<32x32xf32>, vector<32x2xf32>, vector<32x2xf32> -> vector<32x2xf32>
    %c1_12 = arith.constant 1 : index
    %c0_13 = arith.constant 0 : index
    %c0_14 = arith.constant 0 : index
    %16 = vector.load %arg1[%c1_12, %c0_13, %c0_14] : memref<3x32x1xf32, #tpu.memory_space<vmem>>, vector<1x32x1xf32>
    %17 = vector.shape_cast %16 : vector<1x32x1xf32> to vector<32x1xf32>
    %18 = vector.broadcast %17 : vector<32x1xf32> to vector<32x2xf32>
    %19 = arith.addf %15, %18 : vector<32x2xf32>
    %cst_15 = arith.constant 0.000000e+00 : f32
    %20 = vector.broadcast %cst_15 : f32 to vector<32x2xf32>
    %21 = arith.cmpf ogt, %19, %20 : vector<32x2xf32>
    %cst_16 = arith.constant 2.000000e-01 : f32
    %22 = vector.broadcast %cst_16 : f32 to vector<32x2xf32>
    %23 = arith.mulf %22, %19 : vector<32x2xf32>
    %24 = arith.select %21, %19, %23 : vector<32x2xi1>, vector<32x2xf32>
    %c2 = arith.constant 2 : index
    %c0_17 = arith.constant 0 : index
    %c0_18 = arith.constant 0 : index
    %25 = vector.load %arg0[%c2, %c0_17, %c0_18] : memref<3x32x32xf32, #tpu.memory_space<vmem>>, vector<1x32x32xf32>
    %26 = vector.shape_cast %25 : vector<1x32x32xf32> to vector<32x32xf32>
    %cst_19 = arith.constant dense<0.000000e+00> : vector<32x2xf32>
    %27 = tpu.matmul %26, %24, %cst_19 {dimension_numbers = #tpu.dot_dimension_numbers<[1], [0], [0], [1], [0, 0, 1, 1], [], []>} : vector<32x32xf32>, vector<32x2xf32>, vector<32x2xf32> -> vector<32x2xf32>
    %c2_20 = arith.constant 2 : index
    %c0_21 = arith.constant 0 : index
    %c0_22 = arith.constant 0 : index
    %28 = vector.load %arg1[%c2_20, %c0_21, %c0_22] : memref<3x32x1xf32, #tpu.memory_space<vmem>>, vector<1x32x1xf32>
    %29 = vector.shape_cast %28 : vector<1x32x1xf32> to vector<32x1xf32>
    %30 = vector.broadcast %29 : vector<32x1xf32> to vector<32x2xf32>
    %31 = arith.addf %27, %30 : vector<32x2xf32>
    %cst_23 = arith.constant 0.000000e+00 : f32
    %32 = vector.broadcast %cst_23 : f32 to vector<32x2xf32>
    %33 = arith.cmpf ogt, %31, %32 : vector<32x2xf32>
    %cst_24 = arith.constant 2.000000e-01 : f32
    %34 = vector.broadcast %cst_24 : f32 to vector<32x2xf32>
    %35 = arith.mulf %34, %31 : vector<32x2xf32>
    %36 = arith.select %33, %31, %35 : vector<32x2xi1>, vector<32x2xf32>
    %c0_25 = arith.constant 0 : index
    %c0_26 = arith.constant 0 : index
    %37 = vector.load %arg3[%c0_25, %c0_26] : memref<32x2xf32, #tpu.memory_space<vmem>>, vector<32x2xf32>
    tpu.vector_store %arg3[%c0_25, %c0_26], %36 {strides = array<i32>} : memref<32x2xf32, #tpu.memory_space<vmem>>, vector<32x2xf32>,
    return
  }
}

</mosaic_0001>

<llo_original>
// kernel: tpu_custom_call.1
$region0: #{tpu_custom_call.1}
  #allocation0 [shape = 'u32[]', space=smem, size = 0x4, offset = 0x4, fixed_abs, tag = 'smem constant byte address 0x4 - core index']
  #allocation1 [shape = 'u32[144,128]{1,0:T(1,128)}', space=vmem, size = 0x12000, scoped, tag = 'internal scratch']
  %s0 = inlined_call_operand.vmem [shape: f32[3,32,32], index: 0, kind: input, shape index: {}]
  %s1 = inlined_call_operand.vmem [shape: f32[3,32,1], index: 1, kind: input, shape index: {}]
  %s2 = inlined_call_operand.vmem [shape: f32[32,2], index: 2, kind: input, shape index: {}]
  %s3 = inlined_call_operand.vmem [shape: f32[32,2], index: 3, kind: output, shape index: {}]
  %s4 = sld [smem:[#allocation0]]
  $region22: #{tpu_custom_call.1} parent=0
    _
  %s6 = ssub.s32 1, %s4
  %s7 = scalar_select 0, %s6, %s4
  // Predicated region
  $region2: #{tpu_custom_call.1} parent=0 // pred_check
    _
  $region3: #{tpu_custom_call.1} parent=0 // pred_check_branch
    %9 = sbr.rel (0) target = $region5
  $region4: #{tpu_custom_call.1} parent=0 // pred_region
    _
  $region5: #{tpu_custom_call.1} parent=0 // pred_fallthru
    _
  // Predicated region
  $region6: #{tpu_custom_call.1} parent=0 // pred_check
    _
  $region7: #{tpu_custom_call.1} parent=0 // pred_check_branch
    %11 = sbr.rel (0) target = $region9
  $region8: #{tpu_custom_call.1} parent=0 // pred_region
    _
  $region9: #{tpu_custom_call.1} parent=0 // pred_fallthru
    _
  // Predicated region
  $region10: #{tpu_custom_call.1} parent=0 // pred_check
    _
  $region11: #{tpu_custom_call.1} parent=0 // pred_check_branch
    %13 = sbr.rel (0) target = $region13
  $region12: #{tpu_custom_call.1} parent=0 // pred_region
    _
  $region13: #{tpu_custom_call.1} parent=0 // pred_fallthru
    _
  %v14 = vld [vmem:[%s2] sm:$0xff]
  %v15 = vld [vmem:[%s2 + $0x8] sm:$0xff]
  %v16 = vld [vmem:[%s2 + $0x10] sm:$0xff]
  %v17 = vld [vmem:[%s2 + $0x18] sm:$0xff]
  %v18 = vld [vmem:[%s0] sm:$0xff]
  %v19 = vld [vmem:[%s0 + $0x8] sm:$0xff]
  %v20 = vld [vmem:[%s0 + $0x10] sm:$0xff]
  %v21 = vld [vmem:[%s0 + $0x18] sm:$0xff]
  %v22 = vld [vmem:[%s1] sm:$0xff]
  %v23 = vld [vmem:[%s1 + $0x8] sm:$0xff]
  %v24 = vld [vmem:[%s1 + $0x10] sm:$0xff]
  %v25 = vld [vmem:[%s1 + $0x18] sm:$0xff]
  %27 = vset.pattern.permute.xlu0 0
  %28 = vperm.xlu0 %27, %v22
  %v29 = vpop.permute.xlu0 %28
  %32 = vset.pattern.permute.xlu0 0
  %33 = vperm.xlu0 %32, %v23
  %v34 = vpop.permute.xlu0 %33
  %37 = vset.pattern.permute.xlu0 0
  %38 = vperm.xlu0 %37, %v24
  %v39 = vpop.permute.xlu0 %38
  %42 = vset.pattern.permute.xlu0 0
  %43 = vperm.xlu0 %42, %v25
  %v44 = vpop.permute.xlu0 %43
  %vm46 = vcmask 261120
  %v48 = vsel %vm46, %v18, 0
  %v51 = vsel %vm46, %v19, 0
  %v54 = vsel %vm46, %v20, 0
  %v57 = vsel %vm46, %v21, 0
  %59 = vmatprep.subr.mxu0 0.0
  %60 = vmatpush1.msra.mxu0 %v14
  %61 = vmatprep.subr.mxu0 0.0
  %62 = vmatpush1.msra.mxu0 %v15
  %63 = vmatprep.subr.mxu0 0.0
  %64 = vmatpush1.msra.mxu0 %v16
  %65 = vmatprep.subr.mxu0 0.0
  %66 = vmatpush1.msra.mxu0 %v17
  %67 = vmatprep.subr.mxu0 0.0
  %68 = vmatpush1.msra.mxu0 0.0
  %69 = vmatprep.subr.mxu0 0.0
  %70 = vmatpush1.msra.mxu0 0.0
  %71 = vmatprep.subr.mxu0 0.0
  %72 = vmatpush1.msra.mxu0 0.0
  %73 = vmatprep.subr.mxu0 0.0
  %74 = vmatpush1.msra.mxu0 0.0
  %75 = vmatprep.subr.mxu0 0.0
  %76 = vmatpush1.msra.mxu0 0.0
  %77 = vmatprep.subr.mxu0 0.0
  %78 = vmatpush1.msra.mxu0 0.0
  %79 = vmatprep.subr.mxu0 0.0
  %80 = vmatpush1.msra.mxu0 0.0
  %81 = vmatprep.subr.mxu0 0.0
  %82 = vmatpush1.msra.mxu0 0.0
  %83 = vmatprep.subr.mxu0 0.0
  %84 = vmatpush1.msra.mxu0 0.0
  %85 = vmatprep.subr.mxu0 0.0
  %86 = vmatpush1.msra.mxu0 0.0
  %87 = vmatprep.subr.mxu0 0.0
  %88 = vmatpush1.msra.mxu0 0.0
  %89 = vmatprep.subr.mxu0 0.0
  %90 = vmatpush1.msra.mxu0 0.0
  %91 = vmatprep.subr.mxu0 0.0
  %92 = vmatpush1.msra.mxu0 0.0
  %93 = vmatprep.subr.mxu0 0.0
  %94 = vmatpush1.msra.mxu0 0.0
  %95 = vmatprep.subr.mxu0 0.0
  %96 = vmatpush1.msra.mxu0 0.0
  %97 = vmatprep.subr.mxu0 0.0
  %98 = vmatpush1.msra.mxu0 0.0
  %99 = vmatprep.subr.mxu0 0.0
  %100 = vmatpush1.msra.mxu0 0.0
  %101 = vmatprep.subr.mxu0 0.0
  %102 = vmatpush1.msra.mxu0 0.0
  %103 = vmatprep.subr.mxu0 0.0
  %104 = vmatpush1.msra.mxu0 0.0
  %105 = vmatprep.subr.mxu0 0.0
  %106 = vmatpush1.msra.mxu0 0.0
  %107 = vmatprep.subr.mxu0 0.0
  %108 = vmatpush1.msra.mxu0 0.0
  %109 = vmatprep.subr.mxu0 0.0
  %110 = vmatpush1.msra.mxu0 0.0
  %111 = vmatprep.subr.mxu0 0.0
  %112 = vmatpush1.msra.mxu0 0.0
  %113 = vmatprep.subr.mxu0 0.0
  %114 = vmatpush1.msra.mxu0 0.0
  %115 = vmatprep.subr.mxu0 0.0
  %116 = vmatpush1.msra.mxu0 0.0
  %117 = vmatprep.subr.mxu0 0.0
  %118 = vmatpush1.msra.mxu0 0.0
  %119 = vmatprep.subr.mxu0 0.0
  %120 = vmatpush1.msra.mxu0 0.0
  %121 = vmatprep.subr.mxu0 0.0
  %122 = vmatpush1.msra.mxu0 0.0
  %123 = vmatprep.mubr.f32.mxu0 0.0
  %124 = vmatmul.mubr.f32.gmra.mrb[0].mxu0 %v48
  %v125 = vpop.f32.mrb[0].mxu0
  %v126 = vadd.f32 %v29, %v125
  %v127 = vpop.f32.mrb[0].mxu0
  %128 = vmatprep.mubr.f32.mxu0 0.0
  %129 = vmatmul.mubr.f32.gmra.mrb[0].mxu0 %v51
  %v130 = vpop.f32.mrb[0].mxu0
  %v131 = vadd.f32 %v34, %v130
  %v132 = vpop.f32.mrb[0].mxu0
  %133 = vmatprep.mubr.f32.mxu0 0.0
  %134 = vmatmul.mubr.f32.gmra.mrb[0].mxu0 %v54
  %v135 = vpop.f32.mrb[0].mxu0
  %v136 = vadd.f32 %v39, %v135
  %v137 = vpop.f32.mrb[0].mxu0
  %138 = vmatprep.mubr.f32.mxu0 0.0
  %139 = vmatmul.mubr.f32.gmra.mrb[0].mxu0 %v57
  %v140 = vpop.f32.mrb[0].mxu0
  %v141 = vadd.f32 %v44, %v140
  %v142 = vpop.f32.mrb[0].mxu0
  %143 = vdwg.mxu0
  %vm144 = vcmp.gt.f32.partialorder %v126, 0.0
  %vm145 = vcmp.gt.f32.partialorder %v131, 0.0
  %vm146 = vcmp.gt.f32.partialorder %v136, 0.0
  %vm147 = vcmp.gt.f32.partialorder %v141, 0.0
  %v148 = vmul.f32 %v126, 0.2
  %v149 = vmul.f32 %v131, 0.2
  %v150 = vmul.f32 %v136, 0.2
  %v151 = vmul.f32 %v141, 0.2
  %v152 = vsel %vm144, %v126, %v148
  %v153 = vsel %vm145, %v131, %v149
  %v154 = vsel %vm146, %v136, %v150
  %v155 = vsel %vm147, %v141, %v151
  %s156 = scalar_lea.vmem %s0, 32
  %v157 = vld [vmem:[%s156] sm:$0xff]
  %v158 = vld [vmem:[%s156 + $0x8] sm:$0xff]
  %v159 = vld [vmem:[%s156 + $0x10] sm:$0xff]
  %v160 = vld [vmem:[%s156 + $0x18] sm:$0xff]
  %s161 = scalar_lea.vmem %s1, 32
  %v162 = vld [vmem:[%s161] sm:$0xff]
  %v163 = vld [vmem:[%s161 + $0x8] sm:$0xff]
  %v164 = vld [vmem:[%s161 + $0x10] sm:$0xff]
  %v165 = vld [vmem:[%s161 + $0x18] sm:$0xff]
  %167 = vset.pattern.permute.xlu0 0
  %168 = vperm.xlu0 %167, %v162
  %v169 = vpop.permute.xlu0 %168
  %172 = vset.pattern.permute.xlu0 0
  %173 = vperm.xlu0 %172, %v163
  %v174 = vpop.permute.xlu0 %173
  %177 = vset.pattern.permute.xlu0 0
  %178 = vperm.xlu0 %177, %v164
  %v179 = vpop.permute.xlu0 %178
  %182 = vset.pattern.permute.xlu0 0
  %183 = vperm.xlu0 %182, %v165
  %v184 = vpop.permute.xlu0 %183
  %v187 = vsel %vm46, %v157, 0
  %v190 = vsel %vm46, %v158, 0
  %v193 = vsel %vm46, %v159, 0
  %v196 = vsel %vm46, %v160, 0
  %198 = vmatprep.subr.mxu0 0.0
  %199 = vmatpush1.msra.mxu0 %v152
  %200 = vmatprep.subr.mxu0 0.0
  %201 = vmatpush1.msra.mxu0 %v153
  %202 = vmatprep.subr.mxu0 0.0
  %203 = vmatpush1.msra.mxu0 %v154
  %204 = vmatprep.subr.mxu0 0.0
  %205 = vmatpush1.msra.mxu0 %v155
  %206 = vmatprep.subr.mxu0 0.0
  %207 = vmatpush1.msra.mxu0 0.0
  %208 = vmatprep.subr.mxu0 0.0
  %209 = vmatpush1.msra.mxu0 0.0
  %210 = vmatprep.subr.mxu0 0.0
  %211 = vmatpush1.msra.mxu0 0.0
  %212 = vmatprep.subr.mxu0 0.0
  %213 = vmatpush1.msra.mxu0 0.0
  %214 = vmatprep.subr.mxu0 0.0
  %215 = vmatpush1.msra.mxu0 0.0
  %216 = vmatprep.subr.mxu0 0.0
  %217 = vmatpush1.msra.mxu0 0.0
  %218 = vmatprep.subr.mxu0 0.0
  %219 = vmatpush1.msra.mxu0 0.0
  %220 = vmatprep.subr.mxu0 0.0
  %221 = vmatpush1.msra.mxu0 0.0
  %222 = vmatprep.subr.mxu0 0.0
  %223 = vmatpush1.msra.mxu0 0.0
  %224 = vmatprep.subr.mxu0 0.0
  %225 = vmatpush1.msra.mxu0 0.0
  %226 = vmatprep.subr.mxu0 0.0
  %227 = vmatpush1.msra.mxu0 0.0
  %228 = vmatprep.subr.mxu0 0.0
  %229 = vmatpush1.msra.mxu0 0.0
  %230 = vmatprep.subr.mxu0 0.0
  %231 = vmatpush1.msra.mxu0 0.0
  %232 = vmatprep.subr.mxu0 0.0
  %233 = vmatpush1.msra.mxu0 0.0
  %234 = vmatprep.subr.mxu0 0.0
  %235 = vmatpush1.msra.mxu0 0.0
  %236 = vmatprep.subr.mxu0 0.0
  %237 = vmatpush1.msra.mxu0 0.0
  %238 = vmatprep.subr.mxu0 0.0
  %239 = vmatpush1.msra.mxu0 0.0
  %240 = vmatprep.subr.mxu0 0.0
  %241 = vmatpush1.msra.mxu0 0.0
  %242 = vmatprep.subr.mxu0 0.0
  %243 = vmatpush1.msra.mxu0 0.0
  %244 = vmatprep.subr.mxu0 0.0
  %245 = vmatpush1.msra.mxu0 0.0
  %246 = vmatprep.subr.mxu0 0.0
  %247 = vmatpush1.msra.mxu0 0.0
  %248 = vmatprep.subr.mxu0 0.0
  %249 = vmatpush1.msra.mxu0 0.0
  %250 = vmatprep.subr.mxu0 0.0
  %251 = vmatpush1.msra.mxu0 0.0
  %252 = vmatprep.subr.mxu0 0.0
  %253 = vmatpush1.msra.mxu0 0.0
  %254 = vmatprep.subr.mxu0 0.0
  %255 = vmatpush1.msra.mxu0 0.0
  %256 = vmatprep.subr.mxu0 0.0
  %257 = vmatpush1.msra.mxu0 0.0
  %258 = vmatprep.subr.mxu0 0.0
  %259 = vmatpush1.msra.mxu0 0.0
  %260 = vmatprep.subr.mxu0 0.0
  %261 = vmatpush1.msra.mxu0 0.0
  %262 = vmatprep.mubr.f32.mxu0 0.0
  %263 = vmatmul.mubr.f32.gmra.mrb[0].mxu0 %v187
  %v264 = vpop.f32.mrb[0].mxu0
  %v265 = vadd.f32 %v169, %v264
  %v266 = vpop.f32.mrb[0].mxu0
  %267 = vmatprep.mubr.f32.mxu0 0.0
  %268 = vmatmul.mubr.f32.gmra.mrb[0].mxu0 %v190
  %v269 = vpop.f32.mrb[0].mxu0
  %v270 = vadd.f32 %v174, %v269
  %v271 = vpop.f32.mrb[0].mxu0
  %272 = vmatprep.mubr.f32.mxu0 0.0
  %273 = vmatmul.mubr.f32.gmra.mrb[0].mxu0 %v193
  %v274 = vpop.f32.mrb[0].mxu0
  %v275 = vadd.f32 %v179, %v274
  %v276 = vpop.f32.mrb[0].mxu0
  %277 = vmatprep.mubr.f32.mxu0 0.0
  %278 = vmatmul.mubr.f32.gmra.mrb[0].mxu0 %v196
  %v279 = vpop.f32.mrb[0].mxu0
  %v280 = vadd.f32 %v184, %v279
  %v281 = vpop.f32.mrb[0].mxu0
  %282 = vdwg.mxu0
  %vm283 = vcmp.gt.f32.partialorder %v265, 0.0
  %vm284 = vcmp.gt.f32.partialorder %v270, 0.0
  %vm285 = vcmp.gt.f32.partialorder %v275, 0.0
  %vm286 = vcmp.gt.f32.partialorder %v280, 0.0
  %v287 = vmul.f32 %v265, 0.2
  %v288 = vmul.f32 %v270, 0.2
  %v289 = vmul.f32 %v275, 0.2
  %v290 = vmul.f32 %v280, 0.2
  %v291 = vsel %vm283, %v265, %v287
  %v292 = vsel %vm284, %v270, %v288
  %v293 = vsel %vm285, %v275, %v289
  %v294 = vsel %vm286, %v280, %v290
  %s295 = scalar_lea.vmem %s0, 64
  %v296 = vld [vmem:[%s295] sm:$0xff]
  %v297 = vld [vmem:[%s295 + $0x8] sm:$0xff]
  %v298 = vld [vmem:[%s295 + $0x10] sm:$0xff]
  %v299 = vld [vmem:[%s295 + $0x18] sm:$0xff]
  %s300 = scalar_lea.vmem %s1, 64
  %v301 = vld [vmem:[%s300] sm:$0xff]
  %v302 = vld [vmem:[%s300 + $0x8] sm:$0xff]
  %v303 = vld [vmem:[%s300 + $0x10] sm:$0xff]
  %v304 = vld [vmem:[%s300 + $0x18] sm:$0xff]
  %306 = vset.pattern.permute.xlu0 0
  %307 = vperm.xlu0 %306, %v301
  %v308 = vpop.permute.xlu0 %307
  %311 = vset.pattern.permute.xlu0 0
  %312 = vperm.xlu0 %311, %v302
  %v313 = vpop.permute.xlu0 %312
  %316 = vset.pattern.permute.xlu0 0
  %317 = vperm.xlu0 %316, %v303
  %v318 = vpop.permute.xlu0 %317
  %321 = vset.pattern.permute.xlu0 0
  %322 = vperm.xlu0 %321, %v304
  %v323 = vpop.permute.xlu0 %322
  %v326 = vsel %vm46, %v296, 0
  %v329 = vsel %vm46, %v297, 0
  %v332 = vsel %vm46, %v298, 0
  %v335 = vsel %vm46, %v299, 0
  %337 = vmatprep.subr.mxu0 0.0
  %338 = vmatpush1.msra.mxu0 %v291
  %339 = vmatprep.subr.mxu0 0.0
  %340 = vmatpush1.msra.mxu0 %v292
  %341 = vmatprep.subr.mxu0 0.0
  %342 = vmatpush1.msra.mxu0 %v293
  %343 = vmatprep.subr.mxu0 0.0
  %344 = vmatpush1.msra.mxu0 %v294
  %345 = vmatprep.subr.mxu0 0.0
  %346 = vmatpush1.msra.mxu0 0.0
  %347 = vmatprep.subr.mxu0 0.0
  %348 = vmatpush1.msra.mxu0 0.0
  %349 = vmatprep.subr.mxu0 0.0
  %350 = vmatpush1.msra.mxu0 0.0
  %351 = vmatprep.subr.mxu0 0.0
  %352 = vmatpush1.msra.mxu0 0.0
  %353 = vmatprep.subr.mxu0 0.0
  %354 = vmatpush1.msra.mxu0 0.0
  %355 = vmatprep.subr.mxu0 0.0
  %356 = vmatpush1.msra.mxu0 0.0
  %357 = vmatprep.subr.mxu0 0.0
  %358 = vmatpush1.msra.mxu0 0.0
  %359 = vmatprep.subr.mxu0 0.0
  %360 = vmatpush1.msra.mxu0 0.0
  %361 = vmatprep.subr.mxu0 0.0
  %362 = vmatpush1.msra.mxu0 0.0
  %363 = vmatprep.subr.mxu0 0.0
  %364 = vmatpush1.msra.mxu0 0.0
  %365 = vmatprep.subr.mxu0 0.0
  %366 = vmatpush1.msra.mxu0 0.0
  %367 = vmatprep.subr.mxu0 0.0
  %368 = vmatpush1.msra.mxu0 0.0
  %369 = vmatprep.subr.mxu0 0.0
  %370 = vmatpush1.msra.mxu0 0.0
  %371 = vmatprep.subr.mxu0 0.0
  %372 = vmatpush1.msra.mxu0 0.0
  %373 = vmatprep.subr.mxu0 0.0
  %374 = vmatpush1.msra.mxu0 0.0
  %375 = vmatprep.subr.mxu0 0.0
  %376 = vmatpush1.msra.mxu0 0.0
  %377 = vmatprep.subr.mxu0 0.0
  %378 = vmatpush1.msra.mxu0 0.0
  %379 = vmatprep.subr.mxu0 0.0
  %380 = vmatpush1.msra.mxu0 0.0
  %381 = vmatprep.subr.mxu0 0.0
  %382 = vmatpush1.msra.mxu0 0.0
  %383 = vmatprep.subr.mxu0 0.0
  %384 = vmatpush1.msra.mxu0 0.0
  %385 = vmatprep.subr.mxu0 0.0
  %386 = vmatpush1.msra.mxu0 0.0
  %387 = vmatprep.subr.mxu0 0.0
  %388 = vmatpush1.msra.mxu0 0.0
  %389 = vmatprep.subr.mxu0 0.0
  %390 = vmatpush1.msra.mxu0 0.0
  %391 = vmatprep.subr.mxu0 0.0
  %392 = vmatpush1.msra.mxu0 0.0
  %393 = vmatprep.subr.mxu0 0.0
  %394 = vmatpush1.msra.mxu0 0.0
  %395 = vmatprep.subr.mxu0 0.0
  %396 = vmatpush1.msra.mxu0 0.0
  %397 = vmatprep.subr.mxu0 0.0
  %398 = vmatpush1.msra.mxu0 0.0
  %399 = vmatprep.subr.mxu0 0.0
  %400 = vmatpush1.msra.mxu0 0.0
  %401 = vmatprep.mubr.f32.mxu0 0.0
  %402 = vmatmul.mubr.f32.gmra.mrb[0].mxu0 %v326
  %v403 = vpop.f32.mrb[0].mxu0
  %v404 = vadd.f32 %v308, %v403
  %v405 = vpop.f32.mrb[0].mxu0
  %406 = vmatprep.mubr.f32.mxu0 0.0
  %407 = vmatmul.mubr.f32.gmra.mrb[0].mxu0 %v329
  %v408 = vpop.f32.mrb[0].mxu0
  %v409 = vadd.f32 %v313, %v408
  %v410 = vpop.f32.mrb[0].mxu0
  %411 = vmatprep.mubr.f32.mxu0 0.0
  %412 = vmatmul.mubr.f32.gmra.mrb[0].mxu0 %v332
  %v413 = vpop.f32.mrb[0].mxu0
  %v414 = vadd.f32 %v318, %v413
  %v415 = vpop.f32.mrb[0].mxu0
  %416 = vmatprep.mubr.f32.mxu0 0.0
  %417 = vmatmul.mubr.f32.gmra.mrb[0].mxu0 %v335
  %v418 = vpop.f32.mrb[0].mxu0
  %v419 = vadd.f32 %v323, %v418
  %v420 = vpop.f32.mrb[0].mxu0
  %421 = vdwg.mxu0
  %vm422 = vcmp.gt.f32.partialorder %v404, 0.0
  %vm423 = vcmp.gt.f32.partialorder %v409, 0.0
  %vm424 = vcmp.gt.f32.partialorder %v414, 0.0
  %vm425 = vcmp.gt.f32.partialorder %v419, 0.0
  %v426 = vmul.f32 %v404, 0.2
  %v427 = vmul.f32 %v409, 0.2
  %v428 = vmul.f32 %v414, 0.2
  %v429 = vmul.f32 %v419, 0.2
  %v430 = vsel %vm422, %v404, %v426
  %v431 = vsel %vm423, %v409, %v427
  %v432 = vsel %vm424, %v414, %v428
  %v433 = vsel %vm425, %v419, %v429
  %vm434 = vcmask 15360
  %435 = vst.msk [vmem:[%s3] sm:$0xff] %vm434, %v430
  %436 = vst.msk [vmem:[%s3 + $0x8] sm:$0xff] %vm434, %v431
  %437 = vst.msk [vmem:[%s3 + $0x10] sm:$0xff] %vm434, %v432
  %438 = vst.msk [vmem:[%s3 + $0x18] sm:$0xff] %vm434, %v433
  // Predicated region
  $region14: #{tpu_custom_call.1} parent=0 // pred_check
    _
  $region15: #{tpu_custom_call.1} parent=0 // pred_check_branch
    %440 = sbr.rel (0) target = $region17
  $region16: #{tpu_custom_call.1} parent=0 // pred_region
    _
  $region17: #{tpu_custom_call.1} parent=0 // pred_fallthru
    _
  // Predicated region
  $region18: #{tpu_custom_call.1} parent=0 // pred_check
    _
  $region19: #{tpu_custom_call.1} parent=0 // pred_check_branch
    %442 = sbr.rel (0) target = $region21
  $region20: #{tpu_custom_call.1} parent=0 // pred_region
    _
  $region21: #{tpu_custom_call.1} parent=0 // pred_fallthru
    _

</llo_original>
